<compile_context>
chip_gen: v5e
topology: v5e:2x2
jax: 0.10.0
libtpu: 0.0.40
codegen_flags: <defaults>
</compile_context>

<pallas_src>
import functools

import jax
import jax.numpy as jnp
import numpy as np
from jax.experimental import pallas as pl
from jax.experimental.pallas import tpu as pltpu

LANE = 128
SUBLANE = 8
MAX_TN = 1024  # cap candidate tile; bf16 tile = MAX_TN*2R*2B double-buffered
               # stays far below v7x's 64 MiB VMEM.


# ----------------------------- Pallas kernel ------------------------------- #

def _nt_matmul_kernel(a_ref, wt_ref, o_ref):
    """o[m, n] = sum_k a[m, k] * wt[k, n]  (f32 accumulation on the MXU)."""
    o_ref[...] = jnp.dot(a_ref[...], wt_ref[...],
                         preferred_element_type=jnp.float32)


def batched_scores(a, wt, tn):
    """a: [M, D] (compute dtype), wt: [D, N] with N % tn == 0  ->  [M, N] f32."""
    M, D = a.shape
    D2, N = wt.shape
    assert D == D2 and N % tn == 0  # guaranteed by prepare_tables
    return pl.pallas_call(
        _nt_matmul_kernel,
        out_shape=jax.ShapeDtypeStruct((M, N), jnp.float32),
        grid=(N // tn,),
        in_specs=[
            # Query slab: same block every step -> stays VMEM-resident.
            pl.BlockSpec((M, D), lambda j: (0, 0)),
            # Streamed table tile, [K, tn] so the MXU consumes it directly.
            # (On v5e, if DMA shows exposed, pipeline_mode=pl.Buffered(3) here.)
            pl.BlockSpec((D, tn), lambda j: (0, j)),
        ],
        out_specs=pl.BlockSpec((M, tn), lambda j: (0, j)),
        compiler_params=pltpu.CompilerParams(
            dimension_semantics=("parallel",)),
    )(a, wt)


# --------------------------- table preparation ----------------------------- #

def _round_up(x, m):
    return (x + m - 1) // m * m


def _choose_tn(n_total_lanes):
    """Pick a large lane-dense tile, preferring >=2 grid steps (v7x 2 TCs)."""
    n_tiles = n_total_lanes // LANE
    tn_tiles = max(1, min(MAX_TN // LANE, n_tiles // 2))
    return tn_tiles * LANE


def prepare_tables(poi_table, user_table, compute_dtype=jnp.bfloat16):
    """One-time (per parameter set) packing of the two candidate tables.

    Returns (wt_all, meta):
      wt_all : [2R, Np_pad + Nu_pad (padded to tile)] transposed, zero-padded,
               dtype-cast concatenation of the POI and user tables.
      meta   : static layout ints (python) consumed at trace time.
    Doing this once outside the per-call hot path keeps forward HBM traffic to
    a single streamed pass over the packed table.
    """
    n_pois, D = poi_table.shape
    n_users = user_table.shape[0]
    np_pad = _round_up(n_pois, LANE)
    nu_pad = _round_up(n_users, LANE)
    tn = _choose_tn(np_pad + nu_pad)
    n_total = _round_up(np_pad + nu_pad, tn)

    wt = jnp.zeros((D, n_total), jnp.float32)
    wt = wt.at[:, :n_pois].set(poi_table.T)
    wt = wt.at[:, np_pad:np_pad + n_users].set(user_table.T)
    meta = dict(n_pois=n_pois, n_users=n_users, off_users=np_pad,
                tn=tn, n_total=n_total)
    return wt.astype(compute_dtype), meta


# --------------------------- plain-JAX glue -------------------------------- #

def _l2_normalize(x, eps=1e-12):
    # torch.nn.functional.normalize(x, dim=1)
    n = jnp.sqrt(jnp.sum(x * x, axis=1, keepdims=True))
    return x / jnp.maximum(n, eps)


def _proj_user(ent, user):
    return ent - user * jnp.sum(user * ent, axis=1, keepdims=True)


def _split(v, rank):
    return v[:, :rank], v[:, rank:]


def build_queries(embs, x, similar, rank, test_transition=True):
    """Gathers + normalize + projection + complex products (tiny, plain JAX)."""
    origin = embs[0][x[:, 6]]
    tran = embs[1][x[:, 8]]
    loc = embs[2][x[:, 3]]
    tim = embs[9][x[:, 1]]
    inv = embs[3][x[:, 5]]
    user = _l2_normalize(embs[10][x[:, 0]])

    origin = _proj_user(origin, user)
    tran = _proj_user(tran, user)
    loc = _proj_user(loc, user)
    tim = _proj_user(tim, user)
    inv = _proj_user(inv, user)

    o = _split(origin, rank)
    t = _split(tran, rank)
    l = _split(loc, rank)
    ti = _split(tim, rank)
    iv = _split(inv, rank)

    if test_transition:
        q_re = o[0] * t[0] - o[1] * t[1]
        q_im = o[0] * t[1] + o[1] * t[0]
    else:
        q_re = ti[0] * iv[0] - ti[1] * iv[1]
        q_im = ti[0] * iv[1] + ti[1] * iv[0]
    q = jnp.concatenate([q_re, q_im], axis=1)                    # [B, 2R]
    # Fold the POI-table user projection into the query (see header).
    q_proj = q - user * jnp.sum(q * user, axis=1, keepdims=True)  # [B, 2R]

    user1 = _l2_normalize(embs[10][similar[:, 0]])
    sim = embs[11][similar[:, 1]]
    u1 = _split(user1, rank)
    s = _split(sim, rank)
    q_sim = jnp.concatenate([u1[0] * s[0] - u1[1] * s[1],
                             u1[1] * s[0] + u1[0] * s[1]], axis=1)  # [Bs, 2R]

    norms = (jnp.sqrt(o[0] ** 2 + o[1] ** 2),
             jnp.sqrt(t[0] ** 2 + t[1] ** 2),
             jnp.sqrt(l[0] ** 2 + l[1] ** 2))
    return q_proj, q_sim, norms


def mcomplex_forward(wt_all, embs, x, similar, *, rank, meta,
                     test_transition=True, compute_dtype=jnp.bfloat16):
    """JAX/Pallas equivalent of MComplEx.forward(x, similar).

    `wt_all`/`meta` come from prepare_tables(embs[2], embs[10]) done once.
    """
    q_proj, q_sim, norms = build_queries(embs, x, similar, rank,
                                         test_transition)
    B, D = q_proj.shape
    Bs = q_sim.shape[0]
    m_pad = _round_up(B + Bs, SUBLANE)
    a = jnp.zeros((m_pad, D), jnp.float32)
    a = a.at[:B].set(q_proj)
    a = a.at[B:B + Bs].set(q_sim)

    out = batched_scores(a.astype(compute_dtype), wt_all, meta["tn"])

    score = out[:B, :meta["n_pois"]]                                   # [B, Np]
    sim_score = out[B:B + Bs,
                    meta["off_users"]:meta["off_users"] + meta["n_users"]]
    return score, sim_score, norms


# ------------------------- exact-formulation reference --------------------- #

def mcomplex_reference(embs, x, similar, rank, test_transition=True):
    """Pure-JAX reference following the PyTorch formulation literally."""
    origin = embs[0][x[:, 6]]
    tran = embs[1][x[:, 8]]
    tim = embs[9][x[:, 1]]
    inv = embs[3][x[:, 5]]
    user = _l2_normalize(embs[10][x[:, 0]])
    origin = _proj_user(origin, user)
    tran = _proj_user(tran, user)
    tim = _proj_user(tim, user)
    inv = _proj_user(inv, user)

    pois = embs[2]
    tmp = jnp.einsum('bd,nd->bn', user, pois, precision="highest")
    right = pois[None, :, :] - tmp[:, :, None] * user[:, None, :]   # [B, N, 2R]
    r_re, r_im = right[:, :, :rank], right[:, :, rank:]

    o = _split(origin, rank)
    t = _split(tran, rank)
    ti = _split(tim, rank)
    iv = _split(inv, rank)
    if test_transition:
        q_re = o[0] * t[0] - o[1] * t[1]
        q_im = o[0] * t[1] + o[1] * t[0]
    else:
        q_re = ti[0] * iv[0] - ti[1] * iv[1]
        q_im = ti[0] * iv[1] + ti[1] * iv[0]
    score = (jnp.einsum('br,bnr->bn', q_re, r_re, precision="highest")
             + jnp.einsum('br,bnr->bn', q_im, r_im, precision="highest"))

    user1 = _l2_normalize(embs[10][similar[:, 0]])
    sim = embs[11][similar[:, 1]]
    u1 = _split(user1, rank)
    s = _split(sim, rank)
    rs_re, rs_im = embs[10][:, :rank], embs[10][:, rank:]
    sim_score = (jnp.einsum('br,nr->bn', u1[0] * s[0] - u1[1] * s[1], rs_re,
                            precision="highest")
                 + jnp.einsum('br,nr->bn', u1[1] * s[0] + u1[0] * s[1], rs_im,
                              precision="highest"))
    return score, sim_score


# --------------------------------- main ------------------------------------ #

if __name__ == "__main__":
    # sizes = (n_users, n_time, n_pois, s3, s4, n_inv, n_tran, n_sim)
    sizes = (128, 64, 256, 32, 32, 64, 64, 64)
    rank = 64
    init_size = 0.001
    B = 8        # query batch
    B_sim = 8    # similarity batch

    key = jax.random.PRNGKey(0)
    # embedding table sizes exactly as in MComplEx.__init__
    emb_sizes = [sizes[2], sizes[6], sizes[2], sizes[5], sizes[3], sizes[4],
                 sizes[4], sizes[4], sizes[1], sizes[1], sizes[0], sizes[7]]
    keys = jax.random.split(key, len(emb_sizes) + 2)
    embs = [init_size * jax.random.normal(keys[i], (n, 2 * rank), jnp.float32)
            for i, n in enumerate(emb_sizes)]

    # x: [B, 9] index tensor; columns used: 0,1,3,5,6,8
    col_max = jnp.array([sizes[0], sizes[1], sizes[3], sizes[2], sizes[1],
                         sizes[5], sizes[2], sizes[4], sizes[6]], jnp.int32)
    xu = jax.random.uniform(keys[-2], (B, 9))
    x = (xu * col_max[None, :].astype(jnp.float32)).astype(jnp.int32)

    sim_max = jnp.array([sizes[0], sizes[7]], jnp.int32)
    su = jax.random.uniform(keys[-1], (B_sim, 2))
    similar = (su * sim_max[None, :].astype(jnp.float32)).astype(jnp.int32)

    # ---- performance path: bf16 packed-table stream, single pallas_call ----
    wt_bf16, meta = prepare_tables(embs[2], embs[10],
                                   compute_dtype=jnp.bfloat16)
    fwd_bf16 = jax.jit(functools.partial(
        mcomplex_forward, rank=rank, meta=meta, test_transition=True,
        compute_dtype=jnp.bfloat16))
    score, sim_score, norms = fwd_bf16(wt_bf16, embs, x, similar)
    jax.block_until_ready((score, sim_score, norms))

    assert score.shape == (B, sizes[2])
    assert sim_score.shape == (B_sim, sizes[0])
    assert all(n.shape == (B, rank) for n in norms)

    # ---- correctness 1: f32 kernel path vs literal PyTorch formulation ----
    wt_f32, meta32 = prepare_tables(embs[2], embs[10],
                                    compute_dtype=jnp.float32)
    fwd_f32 = jax.jit(functools.partial(
        mcomplex_forward, rank=rank, meta=meta32, test_transition=True,
        compute_dtype=jnp.float32))
    score32, sim32, _ = fwd_f32(wt_f32, embs, x, similar)
    ref_score, ref_sim = mcomplex_reference(embs, x, similar, rank, True)
    np.testing.assert_allclose(np.asarray(score32), np.asarray(ref_score),
                               rtol=2e-3, atol=1e-10)
    np.testing.assert_allclose(np.asarray(sim32), np.asarray(ref_sim),
                               rtol=2e-3, atol=1e-10)

    # ---- correctness 2: bf16 kernel path vs bf16-quantized reference ----
    q_proj, q_sim, _ = build_queries(embs, x, similar, rank, True)

    def q16(v):
        return v.astype(jnp.bfloat16).astype(jnp.float32)

    score_qref = jnp.einsum('bd,nd->bn', q16(q_proj), q16(embs[2]),
                            precision="highest")
    sim_qref = jnp.einsum('bd,nd->bn', q16(q_sim), q16(embs[10]),
                          precision="highest")
    np.testing.assert_allclose(np.asarray(score), np.asarray(score_qref),
                               rtol=2e-3, atol=1e-10)
    np.testing.assert_allclose(np.asarray(sim_score), np.asarray(sim_qref),
                               rtol=2e-3, atol=1e-10)

    print("KERNEL_OK")
</pallas_src>

<mosaic_0001>
module attributes {stable_mosaic.version = 11 : i64} {
  func.func @_nt_matmul_kernel(%arg0: i32, %arg1: memref<16x128xbf16, #tpu.memory_space<vmem>>, %arg2: memref<128x128xbf16, #tpu.memory_space<vmem>>, %arg3: memref<16x128xf32, #tpu.memory_space<vmem>>) attributes {dimension_semantics = [#tpu.dimension_semantics<parallel>], iteration_bounds = array<i64: 3>, scalar_prefetch = 0 : i64, scratch_operands = 0 : i64, tpu.core_type = #tpu.core_type<tc>, window_params = [{pipeline_mode = #tpu.pipeline_mode<synchronous>, transform_indices = @transform_0, window_bounds = array<i64: 16, 128>}, {transform_indices = @transform_1, window_bounds = array<i64: 128, 128>}, {transform_indices = @transform_2, window_bounds = array<i64: 16, 128>}]} {
    %c0 = arith.constant 0 : index
    %c0_0 = arith.constant 0 : index
    %0 = vector.load %arg1[%c0, %c0_0] : memref<16x128xbf16, #tpu.memory_space<vmem>>, vector<16x128xbf16>
    %c0_1 = arith.constant 0 : index
    %c0_2 = arith.constant 0 : index
    %1 = vector.load %arg2[%c0_1, %c0_2] : memref<128x128xbf16, #tpu.memory_space<vmem>>, vector<128x128xbf16>
    %cst = arith.constant dense<0.000000e+00> : vector<16x128xf32>
    %2 = tpu.matmul %0, %1, %cst {dimension_numbers = #tpu.dot_dimension_numbers<[1], [0], [0], [1], [0, 0, 1, 1], [], []>} : vector<16x128xbf16>, vector<128x128xbf16>, vector<16x128xf32> -> vector<16x128xf32>
    %c0_3 = arith.constant 0 : index
    %c0_4 = arith.constant 0 : index
    %3 = vector.load %arg3[%c0_3, %c0_4] : memref<16x128xf32, #tpu.memory_space<vmem>>, vector<16x128xf32>
    tpu.vector_store %arg3[%c0_3, %c0_4], %2 {strides = array<i32>} : memref<16x128xf32, #tpu.memory_space<vmem>>, vector<16x128xf32>,
    return
  }
  func.func @transform_0(%arg0: i32) -> (i32, i32) {
    %c0_i32 = arith.constant 0 : i32
    %c0_i32_0 = arith.constant 0 : i32
    %c0_i32_1 = arith.constant 0 : i32
    return %c0_i32, %c0_i32_0 : i32, i32
  }
  func.func @transform_1(%arg0: i32) -> (i32, i32) {
    %c0_i32 = arith.constant 0 : i32
    %c0_i32_0 = arith.constant 0 : i32
    return %c0_i32, %arg0 : i32, i32
  }
  func.func @transform_2(%arg0: i32) -> (i32, i32) {
    %c0_i32 = arith.constant 0 : i32
    %c0_i32_0 = arith.constant 0 : i32
    return %c0_i32, %arg0 : i32, i32
  }
}

</mosaic_0001>

<llo_original>
// kernel: mcomplex_forward.1
$region0: #{mcomplex_forward.1}
  #allocation0 [shape = 'u32[]', space=smem, size = 0x4, offset = 0x4, fixed_abs, tag = 'smem constant byte address 0x4 - core index']
  #allocation1 [shape = 'u32[72,128]{1,0:T(1,128)}', space=vmem, size = 0x9000, scoped, tag = 'internal scratch']
  %s0 = inlined_call_operand.vmem [shape: bf16[16,128], index: 0, kind: input, shape index: {}]
  %s1 = inlined_call_operand.vmem [shape: bf16[128,384], index: 1, kind: input, shape index: {}]
  %s2 = inlined_call_operand.vmem [shape: f32[16,384], index: 2, kind: output, shape index: {}]
  %s3 = sld [smem:[#allocation0]]
  $region116: #{mcomplex_forward.1} parent=0
    _
  %s5 = ssub.s32 1, %s3
  %s6 = scalar_select 0, %s5, %s3
  $region1: #{mcomplex_forward.1} parent=0
    #allocation2 [shape = 'u8[65536]{0}', space=vmem, size = 0x10000, scoped, tag = 'input window, operand 1']
    #allocation3 [shape = 'u8[16384]{0}', space=vmem, size = 0x4000, scoped, tag = 'output window, operand 0']
    loop: start=0, step=1, limit=5
    $region2: #{mcomplex_forward.1} parent=1 // loop_pre_header
      _
    $region3: #{mcomplex_forward.1} parent=1 // loop_header
      %s8 = sphi 0, %s12
      %p9 = scmp.ge.s32.totalorder %s8, 5
      %s16 = sphi 0, %s16
      %s18 = sphi 0, %s16
      %s19 = sphi 0, %s18
      %s33 = sphi 0, %s19
      %s39 = sphi 0, %s41
      %s42 = sphi 0, %s39
      %s43 = sphi 0, %s42
      %s59 = sphi 0, %s43
      %s65 = sphi 0, %s67
      %s68 = sphi 0, %s65
      %s69 = sphi 0, %s68
      %s85 = sphi 0, %s69
    $region4: #{mcomplex_forward.1} parent=1 // loop_header_branch
      %11 = sbr.rel (%p9) target = $region8
    $region5: #{mcomplex_forward.1} parent=1 // loop_body
      %s13 = ssub.s32 %s8, 1
      %s14 = ssub.s32 %s8, 2
      %s15 = sadd.s32 %s8, 1
      %s17 = sadd.s32 %s16, 1
      %p20 = scmp.eq.s32.totalorder %s8, 2
      %p21 = scmp.ne.s32.totalorder %s16, %s18
      %p22 = scmp.eq.s32.totalorder %s8, 0
      %p23 = por %p21, %p22
      %p24 = scmp.ne.s32.totalorder %s16, %s18
      %p25 = scmp.eq.s32.totalorder %s13, 2
      %p26 = por %p24, %p25
      %p27 = scmp.ne.s32.totalorder %s18, %s19
      %p28 = scmp.eq.s32.totalorder %s13, 0
      %p29 = por %p27, %p28
      %p30 = scmp.ne.s32.totalorder %s18, %s19
      %p31 = scmp.eq.s32.totalorder %s14, 2
      %p32 = por %p30, %p31
      %p34 = scmp.ne.s32.totalorder %s19, %s33
      %p35 = scmp.eq.s32.totalorder %s14, 0
      %p36 = por %p34, %p35
      %s37 = ssub.s32 %s8, %s15
      %p38 = scmp.eq.s32.totalorder %s37, 0
      %s40 = sadd.s32 %s39, 1
      %s41 = scalar_select %p38, %s39, %s40
      %p44 = pneg %p38
      %p45 = scmp.eq.s32.totalorder %s8, 2
      %p46 = por %p44, %p45
      %p47 = scmp.ne.s32.totalorder %s39, %s42
      %p48 = scmp.eq.s32.totalorder %s8, 0
      %p49 = por %p47, %p48
      %p50 = scmp.ne.s32.totalorder %s39, %s42
      %p51 = scmp.eq.s32.totalorder %s13, 2
      %p52 = por %p50, %p51
      %p53 = scmp.ne.s32.totalorder %s42, %s43
      %p54 = scmp.eq.s32.totalorder %s13, 0
      %p55 = por %p53, %p54
      %p56 = scmp.ne.s32.totalorder %s42, %s43
      %p57 = scmp.eq.s32.totalorder %s14, 2
      %p58 = por %p56, %p57
      %p60 = scmp.ne.s32.totalorder %s43, %s59
      %p61 = scmp.eq.s32.totalorder %s14, 0
      %p62 = por %p60, %p61
      %s63 = ssub.s32 %s8, %s15
      %p64 = scmp.eq.s32.totalorder %s63, 0
      %s66 = sadd.s32 %s65, 1
      %s67 = scalar_select %p64, %s65, %s66
      %p70 = pneg %p64
      %p71 = scmp.eq.s32.totalorder %s8, 2
      %p72 = por %p70, %p71
      %p73 = scmp.ne.s32.totalorder %s65, %s68
      %p74 = scmp.eq.s32.totalorder %s8, 0
      %p75 = por %p73, %p74
      %p76 = scmp.ne.s32.totalorder %s65, %s68
      %p77 = scmp.eq.s32.totalorder %s13, 2
      %p78 = por %p76, %p77
      %p79 = scmp.ne.s32.totalorder %s68, %s69
      %p80 = scmp.eq.s32.totalorder %s13, 0
      %p81 = por %p79, %p80
      %p82 = scmp.ne.s32.totalorder %s68, %s69
      %p83 = scmp.eq.s32.totalorder %s14, 2
      %p84 = por %p82, %p83
      %p86 = scmp.ne.s32.totalorder %s69, %s85
      %p87 = scmp.eq.s32.totalorder %s14, 0
      %p88 = por %p86, %p87
      %p89 = scmp.le.s32.totalorder 1, %s8
      %p90 = scmp.lt.s32.totalorder %s8, 4
      %p91 = pnand %p89, %p90
      %p92 = pneg %p91
      // Predicated region
      $region9: #{mcomplex_forward.1} parent=5 // pred_check
        _
      $region10: #{mcomplex_forward.1} parent=5 // pred_check_branch
        %94 = sbr.rel (%p91) target = $region12
      $region11: #{mcomplex_forward.1} parent=5 // pred_region
        %s95 = ssub.s32 %s8, 1
        // Predicated region
        $region13: #{mcomplex_forward.1} parent=11 // pred_check
          %p96 = pneg %p29
        $region14: #{mcomplex_forward.1} parent=11 // pred_check_branch
          %98 = sbr.rel (%p96) target = $region16
        $region15: #{mcomplex_forward.1} parent=11 // pred_region
          _
        $region16: #{mcomplex_forward.1} parent=11 // pred_fallthru
          _
      $region12: #{mcomplex_forward.1} parent=5 // pred_fallthru
        _
      %p99 = scmp.lt.s32.totalorder %s8, 3
      // Predicated region
      $region17: #{mcomplex_forward.1} parent=5 // pred_check
        %p100 = pneg %p99
      $region18: #{mcomplex_forward.1} parent=5 // pred_check_branch
        %102 = sbr.rel (%p100) target = $region20
      $region19: #{mcomplex_forward.1} parent=5 // pred_region
        // Predicated region
        $region21: #{mcomplex_forward.1} parent=19 // pred_check
          %p103 = pneg %p49
        $region22: #{mcomplex_forward.1} parent=19 // pred_check_branch
          %105 = sbr.rel (%p103) target = $region24
        $region23: #{mcomplex_forward.1} parent=19 // pred_region
          %s106 = sand.u32 %s39, 1
          %s107 = sand.u32 %s39, 1
          %s108 = smul.addr %s107, 64
          %s109 = scalar_lea.vmem [#allocation2], %s108
          %s110 = smul.addr %s8, 4
          %s111 = scalar_lea.vmem %s1, %s110
          // Predicated region
          $region25: #{mcomplex_forward.1} parent=23 // pred_check
            _
          $region26: #{mcomplex_forward.1} parent=23 // pred_check_branch
            %113 = sbr.rel (0) target = $region28
          $region27: #{mcomplex_forward.1} parent=23 // pred_region
            // Predicated region
            $region29: #{mcomplex_forward.1} parent=27 // pred_check
              _
            $region30: #{mcomplex_forward.1} parent=27 // pred_check_branch
              %115 = sbr.rel target = $region32
            $region31: #{mcomplex_forward.1} parent=27 // pred_region
              // Predicated region
              $region44: #{mcomplex_forward.1} parent=31 // pred_check
                _
              $region45: #{mcomplex_forward.1} parent=31 // pred_check_branch
                %161 = sbr.rel (0) target = $region47
              $region46: #{mcomplex_forward.1} parent=31 // pred_region
                loop: start=0, step=1, limit=1
                $region48: #{mcomplex_forward.1} parent=46 // loop_pre_header
                  _
                $region49: #{mcomplex_forward.1} parent=46 // loop_header
                  %s163 = sphi 0, %s167
                  %p164 = scmp.ge.s32.totalorder %s163, 1
                  %s168 = sphi %s111, %s111
                  %s169 = sphi %s109, %s109
                $region50: #{mcomplex_forward.1} parent=46 // loop_header_branch
                  %166 = sbr.rel (%p164) target = $region54
                $region51: #{mcomplex_forward.1} parent=46 // loop_body
                  _
                $region52: #{mcomplex_forward.1} parent=46 // loop_footer
                  %s167 = sadd.s32 1, %s163
                $region53: #{mcomplex_forward.1} parent=46 // loop_footer_branch
                  %162 = sbr.rel target = $region49
                $region54: #{mcomplex_forward.1} parent=46 // loop_exit
                  _
                %s171 = ssub.s32 16, 1
                loop: start=0, step=1, limit=1
                $region55: #{mcomplex_forward.1} parent=46 // loop_pre_header
                  _
                $region56: #{mcomplex_forward.1} parent=46 // loop_header
                  %s173 = sphi 0, %s177
                  %p174 = scmp.ge.s32.totalorder %s173, 1
                  %s178 = sphi %s111, %s111
                  %s179 = sphi %s109, %s109
                $region57: #{mcomplex_forward.1} parent=46 // loop_header_branch
                  %176 = sbr.rel (%p174) target = $region61
                $region58: #{mcomplex_forward.1} parent=46 // loop_body
                  %v180 = vld [vmem:[%s178] sm:%s171]
                  %181 = vst [vmem:[%s179] sm:%s171] %v180
                  %v182 = vld [vmem:[%s178 + $0xc] sm:%s171]
                  %183 = vst [vmem:[%s179 + $0x4] sm:%s171] %v182
                  %v184 = vld [vmem:[%s178 + $0x18] sm:%s171]
                  %185 = vst [vmem:[%s179 + $0x8] sm:%s171] %v184
                  %v186 = vld [vmem:[%s178 + $0x24] sm:%s171]
                  %187 = vst [vmem:[%s179 + $0xc] sm:%s171] %v186
                  %v188 = vld [vmem:[%s178 + $0x30] sm:%s171]
                  %189 = vst [vmem:[%s179 + $0x10] sm:%s171] %v188
                  %v190 = vld [vmem:[%s178 + $0x3c] sm:%s171]
                  %191 = vst [vmem:[%s179 + $0x14] sm:%s171] %v190
                  %v192 = vld [vmem:[%s178 + $0x48] sm:%s171]
                  %193 = vst [vmem:[%s179 + $0x18] sm:%s171] %v192
                  %v194 = vld [vmem:[%s178 + $0x54] sm:%s171]
                  %195 = vst [vmem:[%s179 + $0x1c] sm:%s171] %v194
                  %v196 = vld [vmem:[%s178 + $0x60] sm:%s171]
                  %197 = vst [vmem:[%s179 + $0x20] sm:%s171] %v196
                  %v198 = vld [vmem:[%s178 + $0x6c] sm:%s171]
                  %199 = vst [vmem:[%s179 + $0x24] sm:%s171] %v198
                  %v200 = vld [vmem:[%s178 + $0x78] sm:%s171]
                  %201 = vst [vmem:[%s179 + $0x28] sm:%s171] %v200
                  %v202 = vld [vmem:[%s178 + $0x84] sm:%s171]
                  %203 = vst [vmem:[%s179 + $0x2c] sm:%s171] %v202
                  %v204 = vld [vmem:[%s178 + $0x90] sm:%s171]
                  %205 = vst [vmem:[%s179 + $0x30] sm:%s171] %v204
                  %v206 = vld [vmem:[%s178 + $0x9c] sm:%s171]
                  %207 = vst [vmem:[%s179 + $0x34] sm:%s171] %v206
                  %v208 = vld [vmem:[%s178 + $0xa8] sm:%s171]
                  %209 = vst [vmem:[%s179 + $0x38] sm:%s171] %v208
                  %v210 = vld [vmem:[%s178 + $0xb4] sm:%s171]
                  %211 = vst [vmem:[%s179 + $0x3c] sm:%s171] %v210
                $region59: #{mcomplex_forward.1} parent=46 // loop_footer
                  %s177 = sadd.s32 1, %s173
                $region60: #{mcomplex_forward.1} parent=46 // loop_footer_branch
                  %172 = sbr.rel target = $region56
                $region61: #{mcomplex_forward.1} parent=46 // loop_exit
                  _
              $region47: #{mcomplex_forward.1} parent=31 // pred_fallthru
                _
            $region32: #{mcomplex_forward.1} parent=27 // pred_fallthru
              _
            // Predicated region
            $region33: #{mcomplex_forward.1} parent=27 // pred_check
              _
            $region34: #{mcomplex_forward.1} parent=27 // pred_check_branch
              %117 = sbr.rel (0) target = $region36
            $region35: #{mcomplex_forward.1} parent=27 // pred_region
              %s119 = ssub.s32 16, 1
              loop: start=0, step=1, limit=1
              $region37: #{mcomplex_forward.1} parent=35 // loop_pre_header
                _
              $region38: #{mcomplex_forward.1} parent=35 // loop_header
                %s121 = sphi 0, %s125
                %p122 = scmp.ge.s32.totalorder %s121, 1
                %s126 = sphi %s111, %s111
                %s127 = sphi %s109, %s109
              $region39: #{mcomplex_forward.1} parent=35 // loop_header_branch
                %124 = sbr.rel (%p122) target = $region43
              $region40: #{mcomplex_forward.1} parent=35 // loop_body
                %v128 = vld [vmem:[%s126] sm:%s119]
                %129 = vst [vmem:[%s127] sm:%s119] %v128
                %v130 = vld [vmem:[%s126 + $0xc] sm:%s119]
                %131 = vst [vmem:[%s127 + $0x4] sm:%s119] %v130
                %v132 = vld [vmem:[%s126 + $0x18] sm:%s119]
                %133 = vst [vmem:[%s127 + $0x8] sm:%s119] %v132
                %v134 = vld [vmem:[%s126 + $0x24] sm:%s119]
                %135 = vst [vmem:[%s127 + $0xc] sm:%s119] %v134
                %v136 = vld [vmem:[%s126 + $0x30] sm:%s119]
                %137 = vst [vmem:[%s127 + $0x10] sm:%s119] %v136
                %v138 = vld [vmem:[%s126 + $0x3c] sm:%s119]
                %139 = vst [vmem:[%s127 + $0x14] sm:%s119] %v138
                %v140 = vld [vmem:[%s126 + $0x48] sm:%s119]
                %141 = vst [vmem:[%s127 + $0x18] sm:%s119] %v140
                %v142 = vld [vmem:[%s126 + $0x54] sm:%s119]
                %143 = vst [vmem:[%s127 + $0x1c] sm:%s119] %v142
                %v144 = vld [vmem:[%s126 + $0x60] sm:%s119]
                %145 = vst [vmem:[%s127 + $0x20] sm:%s119] %v144
                %v146 = vld [vmem:[%s126 + $0x6c] sm:%s119]
                %147 = vst [vmem:[%s127 + $0x24] sm:%s119] %v146
                %v148 = vld [vmem:[%s126 + $0x78] sm:%s119]
                %149 = vst [vmem:[%s127 + $0x28] sm:%s119] %v148
                %v150 = vld [vmem:[%s126 + $0x84] sm:%s119]
                %151 = vst [vmem:[%s127 + $0x2c] sm:%s119] %v150
                %v152 = vld [vmem:[%s126 + $0x90] sm:%s119]
                %153 = vst [vmem:[%s127 + $0x30] sm:%s119] %v152
                %v154 = vld [vmem:[%s126 + $0x9c] sm:%s119]
                %155 = vst [vmem:[%s127 + $0x34] sm:%s119] %v154
                %v156 = vld [vmem:[%s126 + $0xa8] sm:%s119]
                %157 = vst [vmem:[%s127 + $0x38] sm:%s119] %v156
                %v158 = vld [vmem:[%s126 + $0xb4] sm:%s119]
                %159 = vst [vmem:[%s127 + $0x3c] sm:%s119] %v158
              $region41: #{mcomplex_forward.1} parent=35 // loop_footer
                %s125 = sadd.s32 1, %s121
              $region42: #{mcomplex_forward.1} parent=35 // loop_footer_branch
                %120 = sbr.rel target = $region38
              $region43: #{mcomplex_forward.1} parent=35 // loop_exit
                _
            $region36: #{mcomplex_forward.1} parent=27 // pred_fallthru
              _
          $region28: #{mcomplex_forward.1} parent=23 // pred_fallthru
            _
          %212 = vnop
        $region24: #{mcomplex_forward.1} parent=19 // pred_fallthru
          _
      $region20: #{mcomplex_forward.1} parent=5 // pred_fallthru
        _
      %p213 = scmp.le.s32.totalorder 1, %s8
      %p214 = scmp.lt.s32.totalorder %s8, 4
      %p215 = pnand %p213, %p214
      %p216 = pneg %p215
      // Predicated region
      $region62: #{mcomplex_forward.1} parent=5 // pred_check
        _
      $region63: #{mcomplex_forward.1} parent=5 // pred_check_branch
        %218 = sbr.rel (%p215) target = $region65
      $region64: #{mcomplex_forward.1} parent=5 // pred_region
        %s219 = ssub.s32 %s8, 1
        %s220 = sand.u32 %s42, 1
        %s221 = sand.u32 %s42, 1
        %s222 = smul.addr %s221, 64
        %s223 = scalar_lea.vmem [#allocation2], %s222
        // Predicated region
        $region66: #{mcomplex_forward.1} parent=64 // pred_check
          %p224 = pneg %p55
        $region67: #{mcomplex_forward.1} parent=64 // pred_check_branch
          %226 = sbr.rel (%p224) target = $region69
        $region68: #{mcomplex_forward.1} parent=64 // pred_region
          _
        $region69: #{mcomplex_forward.1} parent=64 // pred_fallthru
          _
        %p227 = pneg %p29
        %p228 = pneg %p26
        %s229 = sand.u32 %s42, 1
        %s230 = sand.u32 %s42, 1
        %s231 = smul.addr %s230, 64
        %s232 = scalar_lea.vmem [#allocation2], %s231
        %p233 = pneg %p55
        %p234 = pneg %p52
        %p235 = pneg %p81
        %p236 = pneg %p78
        %s237 = sand.u32 %s68, 1
        %s238 = sand.u32 %s68, 1
        %s239 = smul.addr %s238, 16
        %s240 = scalar_lea.vmem [#allocation3], %s239
        %v241 = vld [vmem:[%s0] sm:$0xf]
        %v242 = vld [vmem:[%s0 + $0x4] sm:$0xf]
        %v243 = vld [vmem:[%s223] sm:$0xf]
        %v244 = vld [vmem:[%s223 + $0x4] sm:$0xf]
        %v245 = vld [vmem:[%s223 + $0x8] sm:$0xf]
        %v246 = vld [vmem:[%s223 + $0xc] sm:$0xf]
        %v247 = vld [vmem:[%s223 + $0x10] sm:$0xf]
        %v248 = vld [vmem:[%s223 + $0x14] sm:$0xf]
        %v249 = vld [vmem:[%s223 + $0x18] sm:$0xf]
        %v250 = vld [vmem:[%s223 + $0x1c] sm:$0xf]
        %v251 = vld [vmem:[%s223 + $0x20] sm:$0xf]
        %v252 = vld [vmem:[%s223 + $0x24] sm:$0xf]
        %v253 = vld [vmem:[%s223 + $0x28] sm:$0xf]
        %v254 = vld [vmem:[%s223 + $0x2c] sm:$0xf]
        %v255 = vld [vmem:[%s223 + $0x30] sm:$0xf]
        %v256 = vld [vmem:[%s223 + $0x34] sm:$0xf]
        %v257 = vld [vmem:[%s223 + $0x38] sm:$0xf]
        %v258 = vld [vmem:[%s223 + $0x3c] sm:$0xf]
        %v261 = vunpack.c.l.b16 %v241
        %v262 = vunpack.c.l.b16 %v242
        %v263 = vpack.c.b16 %v262, %v261
        %v281 = vunpack.c.l.b16 %v243
        %v282 = vunpack.c.l.b16 %v244
        %v283 = vunpack.c.l.b16 %v245
        %v284 = vunpack.c.l.b16 %v246
        %v285 = vunpack.c.l.b16 %v247
        %v286 = vunpack.c.l.b16 %v248
        %v287 = vunpack.c.l.b16 %v249
        %v288 = vunpack.c.l.b16 %v250
        %v289 = vunpack.c.l.b16 %v251
        %v290 = vunpack.c.l.b16 %v252
        %v291 = vunpack.c.l.b16 %v253
        %v292 = vunpack.c.l.b16 %v254
        %v293 = vunpack.c.l.b16 %v255
        %v294 = vunpack.c.l.b16 %v256
        %v295 = vunpack.c.l.b16 %v257
        %v296 = vunpack.c.l.b16 %v258
        %v297 = vpack.c.b16 %v282, %v281
        %v298 = vpack.c.b16 %v284, %v283
        %v299 = vpack.c.b16 %v286, %v285
        %v300 = vpack.c.b16 %v288, %v287
        %v301 = vpack.c.b16 %v290, %v289
        %v302 = vpack.c.b16 %v292, %v291
        %v303 = vpack.c.b16 %v294, %v293
        %v304 = vpack.c.b16 %v296, %v295
        %313 = vmatpush.bf16.msra.mxu0 %v304
        %314 = vmatpush.bf16.msra.mxu0 %v303
        %315 = vmatpush.bf16.msra.mxu0 %v302
        %316 = vmatpush.bf16.msra.mxu0 %v301
        %317 = vmatpush.bf16.msra.mxu0 %v300
        %318 = vmatpush.bf16.msra.mxu0 %v299
        %319 = vmatpush.bf16.msra.mxu0 %v298
        %320 = vmatpush.bf16.msra.mxu0 %v297
        %321 = vmatmul.bf16.gmra.mxu0 %v263
        %v322 = vpop.f32.mrf.mxu0
        %v323 = vadd.f32 0.0, %v322
        %v324 = vpop.f32.mrf.mxu0
        %v325 = vadd.f32 0.0, %v324
        %326 = vdwg.mxu0
        %327 = vst [vmem:[%s240] sm:$0xff] %v323
        %328 = vst [vmem:[%s240 + $0x8] sm:$0xff] %v325
        %s329 = sand.u32 %s68, 1
        %s330 = sand.u32 %s68, 1
        %s331 = smul.addr %s330, 16
        %s332 = scalar_lea.vmem [#allocation3], %s331
        // Predicated region
        $region70: #{mcomplex_forward.1} parent=64 // pred_check
          %p333 = pneg %p78
        $region71: #{mcomplex_forward.1} parent=64 // pred_check_branch
          %335 = sbr.rel (%p333) target = $region73
        $region72: #{mcomplex_forward.1} parent=64 // pred_region
          %s336 = smul.addr %s13, 8
          %s337 = scalar_lea.vmem %s2, %s336
          // Predicated region
          $region74: #{mcomplex_forward.1} parent=72 // pred_check
            _
          $region75: #{mcomplex_forward.1} parent=72 // pred_check_branch
            %339 = sbr.rel (0) target = $region77
          $region76: #{mcomplex_forward.1} parent=72 // pred_region
            // Predicated region
            $region78: #{mcomplex_forward.1} parent=76 // pred_check
              _
            $region79: #{mcomplex_forward.1} parent=76 // pred_check_branch
              %341 = sbr.rel (0) target = $region81
            $region80: #{mcomplex_forward.1} parent=76 // pred_region
              // Predicated region
              $region93: #{mcomplex_forward.1} parent=80 // pred_check
                _
              $region94: #{mcomplex_forward.1} parent=80 // pred_check_branch
                %359 = sbr.rel (0) target = $region96
              $region95: #{mcomplex_forward.1} parent=80 // pred_region
                loop: start=0, step=1, limit=1
                $region97: #{mcomplex_forward.1} parent=95 // loop_pre_header
                  _
                $region98: #{mcomplex_forward.1} parent=95 // loop_header
                  %s361 = sphi 0, %s365
                  %p362 = scmp.ge.s32.totalorder %s361, 1
                  %s366 = sphi %s332, %s332
                  %s367 = sphi %s337, %s337
                $region99: #{mcomplex_forward.1} parent=95 // loop_header_branch
                  %364 = sbr.rel (%p362) target = $region103
                $region100: #{mcomplex_forward.1} parent=95 // loop_body
                  %v368 = vld [vmem:[%s366] sm:$0xff]
                  %369 = vst [vmem:[%s367] sm:$0xff] %v368
                  %v370 = vld [vmem:[%s366 + $0x8] sm:$0xff]
                  %371 = vst [vmem:[%s367 + $0x18] sm:$0xff] %v370
                $region101: #{mcomplex_forward.1} parent=95 // loop_footer
                  %s365 = sadd.s32 1, %s361
                $region102: #{mcomplex_forward.1} parent=95 // loop_footer_branch
                  %360 = sbr.rel target = $region98
                $region103: #{mcomplex_forward.1} parent=95 // loop_exit
                  _
              $region96: #{mcomplex_forward.1} parent=80 // pred_fallthru
                _
              // Predicated region
              $region104: #{mcomplex_forward.1} parent=80 // pred_check
                _
              $region105: #{mcomplex_forward.1} parent=80 // pred_check_branch
                %373 = sbr.rel target = $region107
              $region106: #{mcomplex_forward.1} parent=80 // pred_region
                _
              $region107: #{mcomplex_forward.1} parent=80 // pred_fallthru
                _
            $region81: #{mcomplex_forward.1} parent=76 // pred_fallthru
              _
            // Predicated region
            $region82: #{mcomplex_forward.1} parent=76 // pred_check
              _
            $region83: #{mcomplex_forward.1} parent=76 // pred_check_branch
              %343 = sbr.rel target = $region85
            $region84: #{mcomplex_forward.1} parent=76 // pred_region
              %s345 = ssub.s32 256, 1
              loop: start=0, step=1, limit=1
              $region86: #{mcomplex_forward.1} parent=84 // loop_pre_header
                _
              $region87: #{mcomplex_forward.1} parent=84 // loop_header
                %s347 = sphi 0, %s351
                %p348 = scmp.ge.s32.totalorder %s347, 1
                %s352 = sphi %s332, %s332
                %s353 = sphi %s337, %s337
              $region88: #{mcomplex_forward.1} parent=84 // loop_header_branch
                %350 = sbr.rel (%p348) target = $region92
              $region89: #{mcomplex_forward.1} parent=84 // loop_body
                %v354 = vld [vmem:[%s352] sm:%s345]
                %355 = vst [vmem:[%s353] sm:%s345] %v354
                %v356 = vld [vmem:[%s352 + $0x8] sm:%s345]
                %357 = vst [vmem:[%s353 + $0x18] sm:%s345] %v356
              $region90: #{mcomplex_forward.1} parent=84 // loop_footer
                %s351 = sadd.s32 1, %s347
              $region91: #{mcomplex_forward.1} parent=84 // loop_footer_branch
                %346 = sbr.rel target = $region87
              $region92: #{mcomplex_forward.1} parent=84 // loop_exit
                _
            $region85: #{mcomplex_forward.1} parent=76 // pred_fallthru
              _
          $region77: #{mcomplex_forward.1} parent=72 // pred_fallthru
            _
          %374 = vnop
        $region73: #{mcomplex_forward.1} parent=64 // pred_fallthru
          _
      $region65: #{mcomplex_forward.1} parent=5 // pred_fallthru
        _
      %p375 = scmp.le.s32.totalorder 2, %s8
      // Predicated region
      $region108: #{mcomplex_forward.1} parent=5 // pred_check
        %p376 = pneg %p375
      $region109: #{mcomplex_forward.1} parent=5 // pred_check_branch
        %378 = sbr.rel (%p376) target = $region111
      $region110: #{mcomplex_forward.1} parent=5 // pred_region
        %s379 = ssub.s32 %s8, 2
        // Predicated region
        $region112: #{mcomplex_forward.1} parent=110 // pred_check
          %p380 = pneg %p84
        $region113: #{mcomplex_forward.1} parent=110 // pred_check_branch
          %382 = sbr.rel (%p380) target = $region115
        $region114: #{mcomplex_forward.1} parent=110 // pred_region
          %s383 = sand.u32 %s69, 1
          %s384 = sand.u32 %s69, 1
          %s385 = smul.addr %s384, 16
          %s386 = scalar_lea.vmem [#allocation3], %s385
        $region115: #{mcomplex_forward.1} parent=110 // pred_fallthru
          _
      $region111: #{mcomplex_forward.1} parent=5 // pred_fallthru
        _
    $region6: #{mcomplex_forward.1} parent=1 // loop_footer
      %s12 = sadd.s32 1, %s8
    $region7: #{mcomplex_forward.1} parent=1 // loop_footer_branch
      %7 = sbr.rel target = $region3
    $region8: #{mcomplex_forward.1} parent=1 // loop_exit
      _

</llo_original>
